<compile_context>
chip_gen: v6e
topology: v6e:2x2x1
jax: 0.10.0
libtpu: 0.0.40
codegen_flags: <defaults>
</compile_context>

<pallas_src>
import jax
import jax.numpy as jnp
from jax.experimental import pallas as pl
from jax.experimental.pallas import tpu as pltpu

_LANE = 128
_TARGET_BLOCK_BYTES = 2 * 1024 * 1024  # ~2 MiB/block; 4 buffers fit v5e's 16 MiB


def _round_up(x, m):
    return (x + m - 1) // m * m


def _sine_kernel(x_ref, o_ref, *, w0):
    # Load at HBM dtype, compute sin(w0*x) in f32 (VPU mul + EUP/VPU sin),
    # cast back on store.
    x = x_ref[...].astype(jnp.float32)
    o_ref[...] = jnp.sin(jnp.float32(w0) * x).astype(o_ref.dtype)


def sine(x, w0=30.0):
    """Apply y = sin(w0 * x) elementwise via a Pallas TPU kernel."""
    orig_shape = x.shape

    # Match torch semantics: float inputs keep dtype, non-float promotes.
    if jnp.issubdtype(x.dtype, jnp.floating):
        out_dtype = x.dtype
    else:
        out_dtype = jnp.float32
        x = x.astype(jnp.float32)

    flat = x.reshape(-1)
    n = flat.shape[0]
    if n == 0:
        return jnp.zeros(orig_shape, dtype=out_dtype)

    # Pad only up to an (8, 128)-aligned row count (<= 1023 extra elements).
    row_block = 8 * _LANE
    n_pad = _round_up(n, row_block)
    if n_pad != n:
        flat = jnp.pad(flat, (0, n_pad - n))
    rows = n_pad // _LANE
    x2d = flat.reshape(rows, _LANE)

    # Pick a large tile: ~2 MiB per block, rounded to a multiple of 8 rows.
    itemsize = max(jnp.dtype(x.dtype).itemsize, jnp.dtype(out_dtype).itemsize)
    tile_rows = max(8, (_TARGET_BLOCK_BYTES // (_LANE * itemsize)) // 8 * 8)
    tile_rows = min(tile_rows, rows)
    # Keep at least 2 grid steps when possible (v7x has 2 TensorCores).
    if rows > 8:
        tile_rows = min(tile_rows, _round_up(pl.cdiv(rows, 2), 8))

    grid = (pl.cdiv(rows, tile_rows),)  # partial last block handled by Pallas

    out2d = pl.pallas_call(
        lambda x_ref, o_ref: _sine_kernel(x_ref, o_ref, w0=float(w0)),
        out_shape=jax.ShapeDtypeStruct((rows, _LANE), out_dtype),
        grid_spec=pltpu.PrefetchScalarGridSpec(
            num_scalar_prefetch=0,
            grid=grid,
            in_specs=[pl.BlockSpec((tile_rows, _LANE), lambda i: (i, 0))],
            out_specs=pl.BlockSpec((tile_rows, _LANE), lambda i: (i, 0)),
        ),
        compiler_params=pltpu.CompilerParams(
            dimension_semantics=("parallel",),
        ),
    )(x2d)

    out_flat = out2d.reshape(-1)
    if n_pad != n:
        out_flat = out_flat[:n]
    return out_flat.reshape(orig_shape)


if __name__ == "__main__":
    key = jax.random.PRNGKey(0)
    # Small NCHW-style input consistent with typical SIREN usage.
    x = jax.random.normal(key, (2, 4, 16, 16), dtype=jnp.float32)

    y = jax.block_until_ready(sine(x, w0=30.0))

    # Correctness check against plain JAX reference.
    y_ref = jnp.sin(30.0 * x)
    assert y.shape == x.shape and y.dtype == x.dtype
    assert jnp.max(jnp.abs(y - y_ref)) < 1e-4

    print("KERNEL_OK")
</pallas_src>

<mosaic_0001>
module attributes {stable_mosaic.version = 11 : i64} {
  func.func @_lambda_(%arg0: i32, %arg1: memref<8x128xf32, #tpu.memory_space<vmem>>, %arg2: memref<8x128xf32, #tpu.memory_space<vmem>>) attributes {dimension_semantics = [#tpu.dimension_semantics<parallel>], iteration_bounds = array<i64: 2>, scalar_prefetch = 0 : i64, scratch_operands = 0 : i64, tpu.core_type = #tpu.core_type<tc>, window_params = [{transform_indices = @transform_0, window_bounds = array<i64: 8, 128>}, {transform_indices = @transform_1, window_bounds = array<i64: 8, 128>}]} {
    %c0 = arith.constant 0 : index
    %c0_0 = arith.constant 0 : index
    %0 = vector.load %arg1[%c0, %c0_0] : memref<8x128xf32, #tpu.memory_space<vmem>>, vector<8x128xf32>
    %cst = arith.constant 3.000000e+01 : f32
    %1 = vector.broadcast %cst : f32 to vector<8x128xf32>
    %2 = arith.mulf %1, %0 : vector<8x128xf32>
    %3 = math.sin %2 : vector<8x128xf32>
    %c0_1 = arith.constant 0 : index
    %c0_2 = arith.constant 0 : index
    %4 = vector.load %arg2[%c0_1, %c0_2] : memref<8x128xf32, #tpu.memory_space<vmem>>, vector<8x128xf32>
    tpu.vector_store %arg2[%c0_1, %c0_2], %3 {strides = array<i32>} : memref<8x128xf32, #tpu.memory_space<vmem>>, vector<8x128xf32>,
    return
  }
  func.func @transform_0(%arg0: i32) -> (i32, i32) {
    %c0_i32 = arith.constant 0 : i32
    %c0_i32_0 = arith.constant 0 : i32
    return %arg0, %c0_i32 : i32, i32
  }
  func.func @transform_1(%arg0: i32) -> (i32, i32) {
    %c0_i32 = arith.constant 0 : i32
    %c0_i32_0 = arith.constant 0 : i32
    return %arg0, %c0_i32 : i32, i32
  }
}

</mosaic_0001>

<llo_original>
// kernel: tpu_custom_call.1
$region0: #{tpu_custom_call.1}
  #allocation0 [shape = 'u32[]', space=smem, size = 0x4, offset = 0x4, fixed_abs, tag = 'smem constant byte address 0x4 - core index']
  #allocation1 [shape = 'u32[144,128]{1,0:T(1,128)}', space=vmem, size = 0x12000, scoped, tag = 'internal scratch']
  %s0 = inlined_call_operand.hbm [shape: f32[16,128], index: 0, kind: input, shape index: {}]
  %s1 = inlined_call_operand.hbm [shape: f32[16,128], index: 1, kind: output, shape index: {}]
  %s2 = sld [smem:[#allocation0]]
  $region41: #{tpu_custom_call.1} parent=0
    _
  %s4 = ssub.s32 1, %s2
  %s5 = scalar_select 0, %s4, %s2
  $region1: #{tpu_custom_call.1} parent=0
    #allocation2 [shape = 'u8[8192]{0}', space=vmem, size = 0x2000, scoped, tag = 'input window, operand 0']
    #allocation3 [shape = 's32[2]{0}', space=sflag, size = 0x8, scoped, tag = 'scoped memory for tpu_custom_call.1']
    #allocation4 [shape = 's32[2]{0}', space=sflag, size = 0x8, scoped, tag = 'scoped memory for tpu_custom_call.1']
    #allocation5 [shape = 'u8[8192]{0}', space=vmem, size = 0x2000, scoped, tag = 'output window, operand 0']
    %6 = vsyncpa [#allocation3], 0
    %s7 = scalar_lea.sflag [#allocation3], 1
    %8 = vsyncpa %s7, 0
    %9 = vsyncpa [#allocation4], 0
    %s10 = scalar_lea.sflag [#allocation4], 1
    %11 = vsyncpa %s10, 0
    loop: start=0, step=1, limit=4
    $region2: #{tpu_custom_call.1} parent=1 // loop_pre_header
      _
    $region3: #{tpu_custom_call.1} parent=1 // loop_header
      %s13 = sphi 0, %s17
      %p14 = scmp.ge.s32.totalorder %s13, 4
      %s23 = sphi 0, %s25
      %s26 = sphi 0, %s23
      %s27 = sphi 0, %s26
      %s43 = sphi 0, %s27
      %s49 = sphi 0, %s51
      %s52 = sphi 0, %s49
      %s53 = sphi 0, %s52
      %s69 = sphi 0, %s53
    $region4: #{tpu_custom_call.1} parent=1 // loop_header_branch
      %16 = sbr.rel (%p14) target = $region8
    $region5: #{tpu_custom_call.1} parent=1 // loop_body
      %s18 = ssub.s32 %s13, 1
      %s19 = ssub.s32 %s13, 2
      %s20 = sadd.s32 %s13, 1
      %s21 = ssub.s32 %s13, %s20
      %p22 = scmp.eq.s32.totalorder %s21, 0
      %s24 = sadd.s32 %s23, 1
      %s25 = scalar_select %p22, %s23, %s24
      %p28 = pneg %p22
      %p29 = scmp.eq.s32.totalorder %s13, 1
      %p30 = por %p28, %p29
      %p31 = scmp.ne.s32.totalorder %s23, %s26
      %p32 = scmp.eq.s32.totalorder %s13, 0
      %p33 = por %p31, %p32
      %p34 = scmp.ne.s32.totalorder %s23, %s26
      %p35 = scmp.eq.s32.totalorder %s18, 1
      %p36 = por %p34, %p35
      %p37 = scmp.ne.s32.totalorder %s26, %s27
      %p38 = scmp.eq.s32.totalorder %s18, 0
      %p39 = por %p37, %p38
      %p40 = scmp.ne.s32.totalorder %s26, %s27
      %p41 = scmp.eq.s32.totalorder %s19, 1
      %p42 = por %p40, %p41
      %p44 = scmp.ne.s32.totalorder %s27, %s43
      %p45 = scmp.eq.s32.totalorder %s19, 0
      %p46 = por %p44, %p45
      %s47 = ssub.s32 %s13, %s20
      %p48 = scmp.eq.s32.totalorder %s47, 0
      %s50 = sadd.s32 %s49, 1
      %s51 = scalar_select %p48, %s49, %s50
      %p54 = pneg %p48
      %p55 = scmp.eq.s32.totalorder %s13, 1
      %p56 = por %p54, %p55
      %p57 = scmp.ne.s32.totalorder %s49, %s52
      %p58 = scmp.eq.s32.totalorder %s13, 0
      %p59 = por %p57, %p58
      %p60 = scmp.ne.s32.totalorder %s49, %s52
      %p61 = scmp.eq.s32.totalorder %s18, 1
      %p62 = por %p60, %p61
      %p63 = scmp.ne.s32.totalorder %s52, %s53
      %p64 = scmp.eq.s32.totalorder %s18, 0
      %p65 = por %p63, %p64
      %p66 = scmp.ne.s32.totalorder %s52, %s53
      %p67 = scmp.eq.s32.totalorder %s19, 1
      %p68 = por %p66, %p67
      %p70 = scmp.ne.s32.totalorder %s53, %s69
      %p71 = scmp.eq.s32.totalorder %s19, 0
      %p72 = por %p70, %p71
      %p73 = scmp.le.s32.totalorder 1, %s13
      %p74 = scmp.lt.s32.totalorder %s13, 3
      %p75 = pnand %p73, %p74
      %p76 = pneg %p75
      // Predicated region
      $region9: #{tpu_custom_call.1} parent=5 // pred_check
        _
      $region10: #{tpu_custom_call.1} parent=5 // pred_check_branch
        %78 = sbr.rel (%p75) target = $region12
      $region11: #{tpu_custom_call.1} parent=5 // pred_region
        %s79 = ssub.s32 %s13, 1
      $region12: #{tpu_custom_call.1} parent=5 // pred_fallthru
        _
      %p80 = scmp.lt.s32.totalorder %s13, 2
      // Predicated region
      $region13: #{tpu_custom_call.1} parent=5 // pred_check
        %p81 = pneg %p80
      $region14: #{tpu_custom_call.1} parent=5 // pred_check_branch
        %83 = sbr.rel (%p81) target = $region16
      $region15: #{tpu_custom_call.1} parent=5 // pred_region
        // Predicated region
        $region17: #{tpu_custom_call.1} parent=15 // pred_check
          %p84 = pneg %p33
        $region18: #{tpu_custom_call.1} parent=15 // pred_check_branch
          %86 = sbr.rel (%p84) target = $region20
        $region19: #{tpu_custom_call.1} parent=15 // pred_region
          %s87 = sand.u32 %s23, 1
          %s88 = scalar_lea.sflag [#allocation3], %s87
          %s89 = sand.u32 %s23, 1
          %s90 = smul.addr %s89, 8
          %s91 = scalar_lea.vmem [#allocation2], %s90
          %s93 = ssub.s32 128, 128
          %94 = vsyncadd %s88, %s93
          %s95 = smul.addr %s13, 128
          %s96 = scalar_lea.hbm %s0, %s95
          %s98 = sshll.u32 %s91, 4
          %s99 = int_to_ptr.vmem [resolvable:$true] %s98
          %101 = dma.hbm_to_vmem [thread:$0]  %s96, 128, %s99, %s88
        $region20: #{tpu_custom_call.1} parent=15 // pred_fallthru
          _
      $region16: #{tpu_custom_call.1} parent=5 // pred_fallthru
        _
      %p102 = scmp.le.s32.totalorder 1, %s13
      %p103 = scmp.lt.s32.totalorder %s13, 3
      %p104 = pnand %p102, %p103
      %p105 = pneg %p104
      // Predicated region
      $region21: #{tpu_custom_call.1} parent=5 // pred_check
        _
      $region22: #{tpu_custom_call.1} parent=5 // pred_check_branch
        %107 = sbr.rel (%p104) target = $region24
      $region23: #{tpu_custom_call.1} parent=5 // pred_region
        %s108 = ssub.s32 %s13, 1
        %s109 = sand.u32 %s26, 1
        %s110 = scalar_lea.sflag [#allocation3], %s109
        %s111 = sand.u32 %s26, 1
        %s112 = smul.addr %s111, 8
        %s113 = scalar_lea.vmem [#allocation2], %s112
        // Predicated region
        $region25: #{tpu_custom_call.1} parent=23 // pred_check
          %p114 = pneg %p39
        $region26: #{tpu_custom_call.1} parent=23 // pred_check_branch
          %116 = sbr.rel (%p114) target = $region28
        $region27: #{tpu_custom_call.1} parent=23 // pred_region
          %117 = dma.done %s110, 128
        $region28: #{tpu_custom_call.1} parent=23 // pred_fallthru
          _
        %s118 = sand.u32 %s26, 1
        %s119 = scalar_lea.sflag [#allocation3], %s118
        %s120 = sand.u32 %s26, 1
        %s121 = smul.addr %s120, 8
        %s122 = scalar_lea.vmem [#allocation2], %s121
        %p123 = pneg %p39
        %p124 = pneg %p36
        %p125 = pneg %p65
        %p126 = pneg %p62
        %s127 = sand.u32 %s52, 1
        %s128 = scalar_lea.sflag [#allocation4], %s127
        %s129 = sand.u32 %s52, 1
        %s130 = smul.addr %s129, 8
        %s131 = scalar_lea.vmem [#allocation5], %s130
        %v132 = vld [vmem:[%s113] sm:$0xff]
        %v133 = vmul.f32 %v132, 30.0
        %v134 = vand.u32 2147483647, %v133
        %vm135 = vcmp.le.f32.partialorder %v134, 0.7853982
        %vm136 = vcmp.lt.s32.totalorder %v133, 0
        %v137 = vand.u32 %v133, 2139095040
        %v138 = vshrl.u32 %v137, 23
        %v139 = vsub.s32 %v138, 127
        %v140 = vand.u32 2147483647, %v133
        %v141 = vand.u32 %v140, 8388607
        %v142 = vor.u32 %v141, 8388608
        %v143 = vsub.s32 0, %v142
        %v144 = vadd.s32 %v139, 1
        %vm145 = vcmp.gt.s32.totalorder %v144, 0
        %v146 = vsel %vm145, %v144, 0
        %v147 = vshrl.u32 %v146, 5
        %v148 = vand.u32 %v146, 31
        %v149 = vsub.s32 32, %v148
        %v150 = vshrl.u32 683565275, %v149
        %v151 = vshll.u32 683565275, %v148
        %v152 = vshrl.u32 2475754826, %v149
        %v153 = vor.u32 %v151, %v152
        %v154 = vshll.u32 2475754826, %v148
        %v155 = vshrl.u32 2131351028, %v149
        %v156 = vor.u32 %v154, %v155
        %v157 = vshll.u32 2131351028, %v148
        %v158 = vshrl.u32 2102212464, %v149
        %v159 = vor.u32 %v157, %v158
        %v160 = vshll.u32 2102212464, %v148
        %v161 = vshrl.u32 920167782, %v149
        %v162 = vor.u32 %v160, %v161
        %v163 = vshll.u32 920167782, %v148
        %v164 = vshrl.u32 1326507024, %v149
        %v165 = vor.u32 %v163, %v164
        %vm166 = vcmp.lt.s32.totalorder %v147, 1
        %vm167 = vcmp.lt.s32.totalorder %v147, 2
        %vm168 = vcmp.lt.s32.totalorder %v147, 3
        %vm169 = vcmp.lt.s32.totalorder %v147, 4
        %v170 = vsel %vm166, %v150, %v153
        %v171 = vsel %vm169, %v159, 2102212464
        %v172 = vsel %vm168, %v156, %v171
        %v173 = vsel %vm167, %v170, %v172
        %v174 = vsel %vm166, %v153, %v156
        %v175 = vsel %vm169, %v162, 920167782
        %v176 = vsel %vm168, %v159, %v175
        %v177 = vsel %vm167, %v174, %v176
        %v178 = vsel %vm166, %v156, %v159
        %v179 = vsel %vm169, %v165, 1326507024
        %v180 = vsel %vm168, %v162, %v179
        %v181 = vsel %vm167, %v178, %v180
        %v182 = vshll.u32 %v142, 8
        %v183 = vmul.u32.u64.compose %v182, %v181
        %v184 = vextract.low.u32 %v183
        %v185 = vextract.high.u32 %v183
        %v186 = vmul.u32.u64.compose %v182, %v177
        %v187 = vextract.low.u32 %v186
        %v188 = vextract.high.u32 %v186
        %v189 = vmul.u32 %v182, %v173
        %v190 = vadd.s32 %v185, %v187
        %vm191 = vc.u32 %v185, %v187
        %v192 = vadd.s32 %v188, 1
        %v193 = vsel %vm191, %v192, %v188
        %v194 = vadd.s32 %v189, %v193
        %v195 = vadd.s32 %v194, 536870912
        %v196 = vshrl.u32 %v195, 30
        %v197 = vshll.u32 %v196, 30
        %v198 = vsub.s32 %v194, %v197
        %vm199 = vcmp.lt.s32.totalorder %v198, 0
        %v200 = vsub.s32 0, %v198
        %v201 = vsel %vm199, %v200, %v198
        %v202 = vclz %v201
        %v203 = vsub.s32 %v202, 2
        %vm204 = vcmp.gt.s32.totalorder 0, %v203
        %v205 = vsel %vm204, 0, %v203
        %v206 = vsub.s32 32, %v205
        %v207 = vshll.u32 %v198, %v205
        %v208 = vshrl.u32 %v190, %v206
        %v209 = vor.u32 %v207, %v208
        %v210 = vsub.s32 4294967266, %v205
        %v211 = vadd.s32 %v210, 127
        %v212 = vshll.u32 %v211, 23
        %v213 = vor.u32 4788187, %v212
        %v214 = vand.u32 2147483647, %v213
        %v216 = vcvt.s32.f32 %v209
        %v217 = vmul.f32 %v216, %v214
        %v218 = vxor.u32 %v217, 2147483648
        %v219 = vsel %vm136, %v218, %v217
        %v220 = vsub.s32 4, %v196
        %v221 = vsel %vm136, %v220, %v196
        %v222 = vsel %vm135, %v133, %v219
        %v223 = vsel %vm135, 0, %v221
        %v224 = vcosq.f32.pop %v222
        %v225 = vsinq.f32.pop %v222
        %vm226 = vweird.f32 %v133
        %v227 = vadd.s32 %v223, 3
        %v228 = vand.u32 %v227, 3
        %vm229 = vcmp.lt.s32.totalorder %v228, 2
        %vm230 = vcmp.eq.s32.totalorder %v228, 0
        %v231 = vxor.u32 %v225, 2147483648
        %v232 = vsel %vm230, %v224, %v231
        %vm233 = vcmp.eq.s32.totalorder %v228, 2
        %v234 = vxor.u32 %v224, 2147483648
        %v235 = vsel %vm233, %v234, %v225
        %v236 = vsel %vm229, %v232, %v235
        %v237 = vsel %vm226, nan, %v236
        %238 = vst [vmem:[%s131] sm:$0xff] %v237
        %s239 = sand.u32 %s52, 1
        %s240 = scalar_lea.sflag [#allocation4], %s239
        %s241 = sand.u32 %s52, 1
        %s242 = smul.addr %s241, 8
        %s243 = scalar_lea.vmem [#allocation5], %s242
        // Predicated region
        $region29: #{tpu_custom_call.1} parent=23 // pred_check
          %p244 = pneg %p62
        $region30: #{tpu_custom_call.1} parent=23 // pred_check_branch
          %246 = sbr.rel (%p244) target = $region32
        $region31: #{tpu_custom_call.1} parent=23 // pred_region
          %s248 = ssub.s32 128, 128
          %249 = vsyncadd %s240, %s248
          %s250 = smul.addr %s18, 128
          %s251 = scalar_lea.hbm %s1, %s250
          %s253 = sshll.u32 %s243, 4
          %s254 = int_to_ptr.vmem [resolvable:$true] %s253
          %256 = dma.vmem_to_hbm [thread:$0]  %s254, 128, %s251, %s240
        $region32: #{tpu_custom_call.1} parent=23 // pred_fallthru
          _
      $region24: #{tpu_custom_call.1} parent=5 // pred_fallthru
        _
      %p257 = scmp.le.s32.totalorder 2, %s13
      // Predicated region
      $region33: #{tpu_custom_call.1} parent=5 // pred_check
        %p258 = pneg %p257
      $region34: #{tpu_custom_call.1} parent=5 // pred_check_branch
        %260 = sbr.rel (%p258) target = $region36
      $region35: #{tpu_custom_call.1} parent=5 // pred_region
        %s261 = ssub.s32 %s13, 2
        // Predicated region
        $region37: #{tpu_custom_call.1} parent=35 // pred_check
          %p262 = pneg %p68
        $region38: #{tpu_custom_call.1} parent=35 // pred_check_branch
          %264 = sbr.rel (%p262) target = $region40
        $region39: #{tpu_custom_call.1} parent=35 // pred_region
          %s265 = sand.u32 %s53, 1
          %s266 = scalar_lea.sflag [#allocation4], %s265
          %s267 = sand.u32 %s53, 1
          %s268 = smul.addr %s267, 8
          %s269 = scalar_lea.vmem [#allocation5], %s268
          %270 = dma.done %s266, 128
        $region40: #{tpu_custom_call.1} parent=35 // pred_fallthru
          _
      $region36: #{tpu_custom_call.1} parent=5 // pred_fallthru
        _
    $region6: #{tpu_custom_call.1} parent=1 // loop_footer
      %s17 = sadd.s32 1, %s13
    $region7: #{tpu_custom_call.1} parent=1 // loop_footer_branch
      %12 = sbr.rel target = $region3
    $region8: #{tpu_custom_call.1} parent=1 // loop_exit
      _
    %271 = vsyncpa [#allocation3], 1
    %s272 = scalar_lea.sflag [#allocation3], 1
    %273 = vsyncpa %s272, 1
    %274 = vsyncpa [#allocation4], 1
    %s275 = scalar_lea.sflag [#allocation4], 1
    %276 = vsyncpa %s275, 1

</llo_original>
